<compile_context>
chip_gen: v7x
topology: tpu7x:2x2x1
jax: 0.10.0
libtpu: 0.0.40
codegen_flags: <defaults>
</compile_context>

<pallas_src>
import math
import numpy as np
import jax
import jax.numpy as jnp
from jax.experimental import pallas as pl
from jax.experimental.pallas import tpu as pltpu

T_WIN = 50   # time window consumed by the policy network
T_OUT = 48   # 50 - 3 + 1 after the (3,1) conv


def make_actor_kernel(A):
    def kernel(xt_ref, lpv_ref, w2_ref, b2_ref, w3h_ref, w1_ref, sc_ref, out_ref):
        # xt_ref : (9, 48, A)  pre-shifted taps, tap = c*3 + dt
        # lpv_ref: (1, A)      last portfolio vector (channel 0, time 0)
        # w2_ref : (2, 20, 48) conv2 weight per input channel
        # b2_ref : (20, 1)     conv2 bias (broadcast over lanes)
        # w3h_ref: (1, 20)     first 20 input channels of the 1x1 conv3
        # w1_ref : (18,) SMEM  conv1 weight (2,3,3) flattened
        # sc_ref : (4,)  SMEM  [b1_0, b1_1, w3_20, b3]
        # out_ref: (1, A+1)    softmax row for this batch element

        # ---- conv_EIIE_1 / Conv2d(3, 2, (3,1)) + ReLU : pure VPU FMAs -------
        hs = []
        for c2 in range(2):
            acc = xt_ref[0] * w1_ref[c2 * 9]                    # init from first tap
            for tap in range(1, 9):
                acc = acc + xt_ref[tap] * w1_ref[c2 * 9 + tap]
            hs.append(jnp.maximum(acc + sc_ref[c2], 0.0))       # (48, A)

        # ---- conv_EIIE_1 / Conv2d(2, 20, (48,1)) + ReLU : two MXU dots ------
        h2 = jnp.dot(w2_ref[0], hs[0], preferred_element_type=jnp.float32)
        h2 = h2 + jnp.dot(w2_ref[1], hs[1], preferred_element_type=jnp.float32)
        h2 = jnp.maximum(h2 + b2_ref[...], 0.0)                 # (20, A)

        # ---- conv_EIIE_2 / 1x1 conv over 21 ch (20 feats + lpv) on MXU ------
        score = jnp.dot(w3h_ref[...], h2, preferred_element_type=jnp.float32)  # (1, A)
        score = score + lpv_ref[...] * sc_ref[2] + sc_ref[3]

        # ---- add_bias (implicit logit 1.0) + Softmax(dim=1), fused ----------
        m = jnp.maximum(jnp.max(score, axis=1, keepdims=True), 1.0)
        e = jnp.exp(score - m)                                  # (1, A)
        e0 = jnp.exp(1.0 - m)                                   # (1, 1) bias logit
        r = pl.reciprocal(jnp.sum(e, axis=1, keepdims=True) + e0, approx=True)
        out_ref[:, 0:1] = e0 * r
        out_ref[:, 1:] = e * r

    return kernel


def actor_forward(state, params):
    B, T, A, C = state.shape
    assert C == 3 and T >= T_WIN
    st = state.astype(jnp.float32)

    # Wrapper-side layout prep (XLA glue): slice the 50-step window FIRST,
    # then pre-shift the three temporal taps so the kernel sees aligned tiles.
    x_win = st[:, T - T_WIN:, :, :]                                        # (B, 50, A, 3)
    taps = jnp.stack([x_win[:, dt:dt + T_OUT] for dt in range(3)], axis=1)  # (B,3dt,48,A,3c)
    x_taps = jnp.transpose(taps, (0, 4, 1, 2, 3)).reshape(B, 9, T_OUT, A)   # tap = c*3+dt
    lpv = st[:, 0, :, 0].reshape(B, 1, A)                                   # channel 0, time 0

    w1, b1, w2, b2, w3, b3 = (params[k] for k in ("w1", "b1", "w2", "b2", "w3", "b3"))
    w1f = w1.reshape(18)                                # (2,3,3) -> c2*9 + c*3 + dt
    w2s = jnp.transpose(w2, (1, 0, 2))                  # (2, 20, 48) per input channel
    b2c = b2.reshape(20, 1)
    w3h = w3[:20].reshape(1, 20)
    scal = jnp.stack([b1[0], b1[1], w3[20], jnp.reshape(b3, ())])           # SMEM scalars

    smem = pl.BlockSpec(memory_space=pltpu.MemorySpace.SMEM)

    out = pl.pallas_call(
        make_actor_kernel(A),
        out_shape=jax.ShapeDtypeStruct((B, 1, A + 1), jnp.float32),
        grid=(B,),
        in_specs=[
            pl.BlockSpec((None, 9, T_OUT, A), lambda b: (b, 0, 0, 0)),  # x taps
            pl.BlockSpec((None, 1, A), lambda b: (b, 0, 0)),            # lpv
            pl.BlockSpec((2, 20, T_OUT), lambda b: (0, 0, 0)),          # w2 (both channels)
            pl.BlockSpec((20, 1), lambda b: (0, 0)),                    # b2
            pl.BlockSpec((1, 20), lambda b: (0, 0)),                    # w3[:20]
            smem,                                                       # w1 flat
            smem,                                                       # [b1_0, b1_1, w3_20, b3]
        ],
        out_specs=pl.BlockSpec((None, 1, A + 1), lambda b: (b, 0, 0)),
        compiler_params=pltpu.CompilerParams(dimension_semantics=("parallel",)),
    )(x_taps, lpv, w2s, b2c, w3h, w1f, scal)
    return out.reshape(B, A + 1)


def actor_forward_ref(state, params):
    # Pure-JAX reference (same math, written independently with einsums).
    s = jnp.transpose(state, (0, 3, 1, 2)).astype(jnp.float32)
    x = s[:, :, -T_WIN:, :]                                      # (B, 3, 50, A)
    lpv = s[:, 0:1, 0:1, :]                                      # (B, 1, 1, A)
    w1, b1, w2, b2, w3, b3 = (params[k] for k in ("w1", "b1", "w2", "b2", "w3", "b3"))

    wins = jnp.stack([x[:, :, dt:dt + T_OUT, :] for dt in range(3)], axis=2)  # (B,3,3,48,A)
    out1 = jax.nn.relu(jnp.einsum("bcdta,ocd->bota", wins, w1) + b1[None, :, None, None])
    out2 = jax.nn.relu(jnp.einsum("bcta,oct->boa", out1, w2) + b2[None, :, None])
    feat = jnp.concatenate([out2, lpv[:, :, 0, :]], axis=1)      # (B, 21, A)
    score = jnp.einsum("bca,c->ba", feat, w3) + b3
    logits = jnp.concatenate([jnp.ones((score.shape[0], 1), jnp.float32), score], axis=1)
    return jax.nn.softmax(logits, axis=1)


def init_params():
    kp = jax.random.PRNGKey(42)
    ks = jax.random.split(kp, 6)
    b1_bound = 1.0 / math.sqrt(3 * 3 * 1)
    b2_bound = 1.0 / math.sqrt(2 * 48 * 1)
    b3_bound = 1.0 / math.sqrt(21 * 1 * 1)
    return dict(
        w1=jax.random.uniform(ks[0], (2, 3, 3), jnp.float32, -b1_bound, b1_bound),
        b1=jax.random.uniform(ks[1], (2,), jnp.float32, -b1_bound, b1_bound),
        w2=jax.random.uniform(ks[2], (20, 2, 48), jnp.float32, -b2_bound, b2_bound),
        b2=jax.random.uniform(ks[3], (20,), jnp.float32, -b2_bound, b2_bound),
        w3=jax.random.uniform(ks[4], (21,), jnp.float32, -b3_bound, b3_bound),
        b3=jax.random.uniform(ks[5], (), jnp.float32, -b3_bound, b3_bound),
    )
    # TODO(synk): fc / fc1_1 / Q_activation / do_return_prediction_Q_value branches are
    # unused by forward(); not implemented.


if __name__ == "__main__":
    B, T, A = 2, 64, 8          # batch, time steps (>=50), assets; 3 price features
    state = jax.random.normal(jax.random.PRNGKey(0), (B, T, A, 3), jnp.float32)
    params = init_params()

    out = actor_forward(state, params)
    out = jax.block_until_ready(out)

    ref = jax.block_until_ready(actor_forward_ref(state, params))
    np.testing.assert_allclose(np.asarray(out), np.asarray(ref), rtol=1e-3, atol=1e-3)
    assert out.shape == (B, A + 1)

    print("KERNEL_OK")
</pallas_src>

<mosaic_0001>
module attributes {stable_mosaic.version = 11 : i64} {
  func.func @kernel(%arg0: i32, %arg1: memref<1x9x48x8xf32, #tpu.memory_space<vmem>>, %arg2: memref<1x1x8xf32, #tpu.memory_space<vmem>>, %arg3: memref<2x20x48xf32, #tpu.memory_space<vmem>>, %arg4: memref<20x1xf32, #tpu.memory_space<vmem>>, %arg5: memref<1x20xf32, #tpu.memory_space<vmem>>, %arg6: memref<18xf32, #tpu.memory_space<smem>>, %arg7: memref<4xf32, #tpu.memory_space<smem>>, %arg8: memref<1x1x9xf32, #tpu.memory_space<vmem>>) attributes {dimension_semantics = [#tpu.dimension_semantics<parallel>], iteration_bounds = array<i64: 2>, scalar_prefetch = 0 : i64, scratch_operands = 0 : i64, tpu.core_type = #tpu.core_type<tc>, window_params = [{transform_indices = @transform_0, window_bounds = array<i64: 1, 9, 48, 8>}, {transform_indices = @transform_1, window_bounds = array<i64: 1, 1, 8>}, {pipeline_mode = #tpu.pipeline_mode<synchronous>, transform_indices = @transform_2, window_bounds = array<i64: 2, 20, 48>}, {pipeline_mode = #tpu.pipeline_mode<synchronous>, transform_indices = @transform_3, window_bounds = array<i64: 20, 1>}, {pipeline_mode = #tpu.pipeline_mode<synchronous>, transform_indices = @transform_4, window_bounds = array<i64: 1, 20>}, {transform_indices = @transform_5, window_bounds = array<i64: 18>}, {transform_indices = @transform_6, window_bounds = array<i64: 4>}, {transform_indices = @transform_7, window_bounds = array<i64: 1, 1, 9>}]} {
    %c0 = arith.constant 0 : index
    %c0_0 = arith.constant 0 : index
    %c0_1 = arith.constant 0 : index
    %c0_2 = arith.constant 0 : index
    %0 = vector.load %arg1[%c0, %c0_0, %c0_1, %c0_2] : memref<1x9x48x8xf32, #tpu.memory_space<vmem>>, vector<1x1x48x8xf32>
    %1 = vector.shape_cast %0 : vector<1x1x48x8xf32> to vector<48x8xf32>
    %c0_3 = arith.constant 0 : index
    %2 = memref.load %arg6[%c0_3] : memref<18xf32, #tpu.memory_space<smem>>
    %3 = vector.broadcast %2 : f32 to vector<48x8xf32>
    %4 = arith.mulf %1, %3 : vector<48x8xf32>
    %c0_4 = arith.constant 0 : index
    %c1 = arith.constant 1 : index
    %c0_5 = arith.constant 0 : index
    %c0_6 = arith.constant 0 : index
    %5 = vector.load %arg1[%c0_4, %c1, %c0_5, %c0_6] : memref<1x9x48x8xf32, #tpu.memory_space<vmem>>, vector<1x1x48x8xf32>
    %6 = vector.shape_cast %5 : vector<1x1x48x8xf32> to vector<48x8xf32>
    %c1_7 = arith.constant 1 : index
    %7 = memref.load %arg6[%c1_7] : memref<18xf32, #tpu.memory_space<smem>>
    %8 = vector.broadcast %7 : f32 to vector<48x8xf32>
    %9 = arith.mulf %6, %8 : vector<48x8xf32>
    %10 = arith.addf %4, %9 : vector<48x8xf32>
    %c0_8 = arith.constant 0 : index
    %c2 = arith.constant 2 : index
    %c0_9 = arith.constant 0 : index
    %c0_10 = arith.constant 0 : index
    %11 = vector.load %arg1[%c0_8, %c2, %c0_9, %c0_10] : memref<1x9x48x8xf32, #tpu.memory_space<vmem>>, vector<1x1x48x8xf32>
    %12 = vector.shape_cast %11 : vector<1x1x48x8xf32> to vector<48x8xf32>
    %c2_11 = arith.constant 2 : index
    %13 = memref.load %arg6[%c2_11] : memref<18xf32, #tpu.memory_space<smem>>
    %14 = vector.broadcast %13 : f32 to vector<48x8xf32>
    %15 = arith.mulf %12, %14 : vector<48x8xf32>
    %16 = arith.addf %10, %15 : vector<48x8xf32>
    %c0_12 = arith.constant 0 : index
    %c3 = arith.constant 3 : index
    %c0_13 = arith.constant 0 : index
    %c0_14 = arith.constant 0 : index
    %17 = vector.load %arg1[%c0_12, %c3, %c0_13, %c0_14] : memref<1x9x48x8xf32, #tpu.memory_space<vmem>>, vector<1x1x48x8xf32>
    %18 = vector.shape_cast %17 : vector<1x1x48x8xf32> to vector<48x8xf32>
    %c3_15 = arith.constant 3 : index
    %19 = memref.load %arg6[%c3_15] : memref<18xf32, #tpu.memory_space<smem>>
    %20 = vector.broadcast %19 : f32 to vector<48x8xf32>
    %21 = arith.mulf %18, %20 : vector<48x8xf32>
    %22 = arith.addf %16, %21 : vector<48x8xf32>
    %c0_16 = arith.constant 0 : index
    %c4 = arith.constant 4 : index
    %c0_17 = arith.constant 0 : index
    %c0_18 = arith.constant 0 : index
    %23 = vector.load %arg1[%c0_16, %c4, %c0_17, %c0_18] : memref<1x9x48x8xf32, #tpu.memory_space<vmem>>, vector<1x1x48x8xf32>
    %24 = vector.shape_cast %23 : vector<1x1x48x8xf32> to vector<48x8xf32>
    %c4_19 = arith.constant 4 : index
    %25 = memref.load %arg6[%c4_19] : memref<18xf32, #tpu.memory_space<smem>>
    %26 = vector.broadcast %25 : f32 to vector<48x8xf32>
    %27 = arith.mulf %24, %26 : vector<48x8xf32>
    %28 = arith.addf %22, %27 : vector<48x8xf32>
    %c0_20 = arith.constant 0 : index
    %c5 = arith.constant 5 : index
    %c0_21 = arith.constant 0 : index
    %c0_22 = arith.constant 0 : index
    %29 = vector.load %arg1[%c0_20, %c5, %c0_21, %c0_22] : memref<1x9x48x8xf32, #tpu.memory_space<vmem>>, vector<1x1x48x8xf32>
    %30 = vector.shape_cast %29 : vector<1x1x48x8xf32> to vector<48x8xf32>
    %c5_23 = arith.constant 5 : index
    %31 = memref.load %arg6[%c5_23] : memref<18xf32, #tpu.memory_space<smem>>
    %32 = vector.broadcast %31 : f32 to vector<48x8xf32>
    %33 = arith.mulf %30, %32 : vector<48x8xf32>
    %34 = arith.addf %28, %33 : vector<48x8xf32>
    %c0_24 = arith.constant 0 : index
    %c6 = arith.constant 6 : index
    %c0_25 = arith.constant 0 : index
    %c0_26 = arith.constant 0 : index
    %35 = vector.load %arg1[%c0_24, %c6, %c0_25, %c0_26] : memref<1x9x48x8xf32, #tpu.memory_space<vmem>>, vector<1x1x48x8xf32>
    %36 = vector.shape_cast %35 : vector<1x1x48x8xf32> to vector<48x8xf32>
    %c6_27 = arith.constant 6 : index
    %37 = memref.load %arg6[%c6_27] : memref<18xf32, #tpu.memory_space<smem>>
    %38 = vector.broadcast %37 : f32 to vector<48x8xf32>
    %39 = arith.mulf %36, %38 : vector<48x8xf32>
    %40 = arith.addf %34, %39 : vector<48x8xf32>
    %c0_28 = arith.constant 0 : index
    %c7 = arith.constant 7 : index
    %c0_29 = arith.constant 0 : index
    %c0_30 = arith.constant 0 : index
    %41 = vector.load %arg1[%c0_28, %c7, %c0_29, %c0_30] : memref<1x9x48x8xf32, #tpu.memory_space<vmem>>, vector<1x1x48x8xf32>
    %42 = vector.shape_cast %41 : vector<1x1x48x8xf32> to vector<48x8xf32>
    %c7_31 = arith.constant 7 : index
    %43 = memref.load %arg6[%c7_31] : memref<18xf32, #tpu.memory_space<smem>>
    %44 = vector.broadcast %43 : f32 to vector<48x8xf32>
    %45 = arith.mulf %42, %44 : vector<48x8xf32>
    %46 = arith.addf %40, %45 : vector<48x8xf32>
    %c0_32 = arith.constant 0 : index
    %c8 = arith.constant 8 : index
    %c0_33 = arith.constant 0 : index
    %c0_34 = arith.constant 0 : index
    %47 = vector.load %arg1[%c0_32, %c8, %c0_33, %c0_34] : memref<1x9x48x8xf32, #tpu.memory_space<vmem>>, vector<1x1x48x8xf32>
    %48 = vector.shape_cast %47 : vector<1x1x48x8xf32> to vector<48x8xf32>
    %c8_35 = arith.constant 8 : index
    %49 = memref.load %arg6[%c8_35] : memref<18xf32, #tpu.memory_space<smem>>
    %50 = vector.broadcast %49 : f32 to vector<48x8xf32>
    %51 = arith.mulf %48, %50 : vector<48x8xf32>
    %52 = arith.addf %46, %51 : vector<48x8xf32>
    %c0_36 = arith.constant 0 : index
    %53 = memref.load %arg7[%c0_36] : memref<4xf32, #tpu.memory_space<smem>>
    %54 = vector.broadcast %53 : f32 to vector<48x8xf32>
    %55 = arith.addf %52, %54 : vector<48x8xf32>
    %cst = arith.constant 0.000000e+00 : f32
    %56 = vector.broadcast %cst : f32 to vector<48x8xf32>
    %57 = arith.maximumf %55, %56 : vector<48x8xf32>
    %c0_37 = arith.constant 0 : index
    %c0_38 = arith.constant 0 : index
    %c0_39 = arith.constant 0 : index
    %c0_40 = arith.constant 0 : index
    %58 = vector.load %arg1[%c0_37, %c0_38, %c0_39, %c0_40] : memref<1x9x48x8xf32, #tpu.memory_space<vmem>>, vector<1x1x48x8xf32>
    %59 = vector.shape_cast %58 : vector<1x1x48x8xf32> to vector<48x8xf32>
    %c9 = arith.constant 9 : index
    %60 = memref.load %arg6[%c9] : memref<18xf32, #tpu.memory_space<smem>>
    %61 = vector.broadcast %60 : f32 to vector<48x8xf32>
    %62 = arith.mulf %59, %61 : vector<48x8xf32>
    %c0_41 = arith.constant 0 : index
    %c1_42 = arith.constant 1 : index
    %c0_43 = arith.constant 0 : index
    %c0_44 = arith.constant 0 : index
    %63 = vector.load %arg1[%c0_41, %c1_42, %c0_43, %c0_44] : memref<1x9x48x8xf32, #tpu.memory_space<vmem>>, vector<1x1x48x8xf32>
    %64 = vector.shape_cast %63 : vector<1x1x48x8xf32> to vector<48x8xf32>
    %c10 = arith.constant 10 : index
    %65 = memref.load %arg6[%c10] : memref<18xf32, #tpu.memory_space<smem>>
    %66 = vector.broadcast %65 : f32 to vector<48x8xf32>
    %67 = arith.mulf %64, %66 : vector<48x8xf32>
    %68 = arith.addf %62, %67 : vector<48x8xf32>
    %c0_45 = arith.constant 0 : index
    %c2_46 = arith.constant 2 : index
    %c0_47 = arith.constant 0 : index
    %c0_48 = arith.constant 0 : index
    %69 = vector.load %arg1[%c0_45, %c2_46, %c0_47, %c0_48] : memref<1x9x48x8xf32, #tpu.memory_space<vmem>>, vector<1x1x48x8xf32>
    %70 = vector.shape_cast %69 : vector<1x1x48x8xf32> to vector<48x8xf32>
    %c11 = arith.constant 11 : index
    %71 = memref.load %arg6[%c11] : memref<18xf32, #tpu.memory_space<smem>>
    %72 = vector.broadcast %71 : f32 to vector<48x8xf32>
    %73 = arith.mulf %70, %72 : vector<48x8xf32>
    %74 = arith.addf %68, %73 : vector<48x8xf32>
    %c0_49 = arith.constant 0 : index
    %c3_50 = arith.constant 3 : index
    %c0_51 = arith.constant 0 : index
    %c0_52 = arith.constant 0 : index
    %75 = vector.load %arg1[%c0_49, %c3_50, %c0_51, %c0_52] : memref<1x9x48x8xf32, #tpu.memory_space<vmem>>, vector<1x1x48x8xf32>
    %76 = vector.shape_cast %75 : vector<1x1x48x8xf32> to vector<48x8xf32>
    %c12 = arith.constant 12 : index
    %77 = memref.load %arg6[%c12] : memref<18xf32, #tpu.memory_space<smem>>
    %78 = vector.broadcast %77 : f32 to vector<48x8xf32>
    %79 = arith.mulf %76, %78 : vector<48x8xf32>
    %80 = arith.addf %74, %79 : vector<48x8xf32>
    %c0_53 = arith.constant 0 : index
    %c4_54 = arith.constant 4 : index
    %c0_55 = arith.constant 0 : index
    %c0_56 = arith.constant 0 : index
    %81 = vector.load %arg1[%c0_53, %c4_54, %c0_55, %c0_56] : memref<1x9x48x8xf32, #tpu.memory_space<vmem>>, vector<1x1x48x8xf32>
    %82 = vector.shape_cast %81 : vector<1x1x48x8xf32> to vector<48x8xf32>
    %c13 = arith.constant 13 : index
    %83 = memref.load %arg6[%c13] : memref<18xf32, #tpu.memory_space<smem>>
    %84 = vector.broadcast %83 : f32 to vector<48x8xf32>
    %85 = arith.mulf %82, %84 : vector<48x8xf32>
    %86 = arith.addf %80, %85 : vector<48x8xf32>
    %c0_57 = arith.constant 0 : index
    %c5_58 = arith.constant 5 : index
    %c0_59 = arith.constant 0 : index
    %c0_60 = arith.constant 0 : index
    %87 = vector.load %arg1[%c0_57, %c5_58, %c0_59, %c0_60] : memref<1x9x48x8xf32, #tpu.memory_space<vmem>>, vector<1x1x48x8xf32>
    %88 = vector.shape_cast %87 : vector<1x1x48x8xf32> to vector<48x8xf32>
    %c14 = arith.constant 14 : index
    %89 = memref.load %arg6[%c14] : memref<18xf32, #tpu.memory_space<smem>>
    %90 = vector.broadcast %89 : f32 to vector<48x8xf32>
    %91 = arith.mulf %88, %90 : vector<48x8xf32>
    %92 = arith.addf %86, %91 : vector<48x8xf32>
    %c0_61 = arith.constant 0 : index
    %c6_62 = arith.constant 6 : index
    %c0_63 = arith.constant 0 : index
    %c0_64 = arith.constant 0 : index
    %93 = vector.load %arg1[%c0_61, %c6_62, %c0_63, %c0_64] : memref<1x9x48x8xf32, #tpu.memory_space<vmem>>, vector<1x1x48x8xf32>
    %94 = vector.shape_cast %93 : vector<1x1x48x8xf32> to vector<48x8xf32>
    %c15 = arith.constant 15 : index
    %95 = memref.load %arg6[%c15] : memref<18xf32, #tpu.memory_space<smem>>
    %96 = vector.broadcast %95 : f32 to vector<48x8xf32>
    %97 = arith.mulf %94, %96 : vector<48x8xf32>
    %98 = arith.addf %92, %97 : vector<48x8xf32>
    %c0_65 = arith.constant 0 : index
    %c7_66 = arith.constant 7 : index
    %c0_67 = arith.constant 0 : index
    %c0_68 = arith.constant 0 : index
    %99 = vector.load %arg1[%c0_65, %c7_66, %c0_67, %c0_68] : memref<1x9x48x8xf32, #tpu.memory_space<vmem>>, vector<1x1x48x8xf32>
    %100 = vector.shape_cast %99 : vector<1x1x48x8xf32> to vector<48x8xf32>
    %c16 = arith.constant 16 : index
    %101 = memref.load %arg6[%c16] : memref<18xf32, #tpu.memory_space<smem>>
    %102 = vector.broadcast %101 : f32 to vector<48x8xf32>
    %103 = arith.mulf %100, %102 : vector<48x8xf32>
    %104 = arith.addf %98, %103 : vector<48x8xf32>
    %c0_69 = arith.constant 0 : index
    %c8_70 = arith.constant 8 : index
    %c0_71 = arith.constant 0 : index
    %c0_72 = arith.constant 0 : index
    %105 = vector.load %arg1[%c0_69, %c8_70, %c0_71, %c0_72] : memref<1x9x48x8xf32, #tpu.memory_space<vmem>>, vector<1x1x48x8xf32>
    %106 = vector.shape_cast %105 : vector<1x1x48x8xf32> to vector<48x8xf32>
    %c17 = arith.constant 17 : index
    %107 = memref.load %arg6[%c17] : memref<18xf32, #tpu.memory_space<smem>>
    %108 = vector.broadcast %107 : f32 to vector<48x8xf32>
    %109 = arith.mulf %106, %108 : vector<48x8xf32>
    %110 = arith.addf %104, %109 : vector<48x8xf32>
    %c1_73 = arith.constant 1 : index
    %111 = memref.load %arg7[%c1_73] : memref<4xf32, #tpu.memory_space<smem>>
    %112 = vector.broadcast %111 : f32 to vector<48x8xf32>
    %113 = arith.addf %110, %112 : vector<48x8xf32>
    %cst_74 = arith.constant 0.000000e+00 : f32
    %114 = vector.broadcast %cst_74 : f32 to vector<48x8xf32>
    %115 = arith.maximumf %113, %114 : vector<48x8xf32>
    %c0_75 = arith.constant 0 : index
    %c0_76 = arith.constant 0 : index
    %c0_77 = arith.constant 0 : index
    %116 = vector.load %arg3[%c0_75, %c0_76, %c0_77] : memref<2x20x48xf32, #tpu.memory_space<vmem>>, vector<1x20x48xf32>
    %117 = vector.shape_cast %116 : vector<1x20x48xf32> to vector<20x48xf32>
    %cst_78 = arith.constant dense<0.000000e+00> : vector<20x8xf32>
    %118 = tpu.matmul %117, %57, %cst_78 {dimension_numbers = #tpu.dot_dimension_numbers<[1], [0], [0], [1], [0, 0, 1, 1], [], []>} : vector<20x48xf32>, vector<48x8xf32>, vector<20x8xf32> -> vector<20x8xf32>
    %c1_79 = arith.constant 1 : index
    %c0_80 = arith.constant 0 : index
    %c0_81 = arith.constant 0 : index
    %119 = vector.load %arg3[%c1_79, %c0_80, %c0_81] : memref<2x20x48xf32, #tpu.memory_space<vmem>>, vector<1x20x48xf32>
    %120 = vector.shape_cast %119 : vector<1x20x48xf32> to vector<20x48xf32>
    %cst_82 = arith.constant dense<0.000000e+00> : vector<20x8xf32>
    %121 = tpu.matmul %120, %115, %cst_82 {dimension_numbers = #tpu.dot_dimension_numbers<[1], [0], [0], [1], [0, 0, 1, 1], [], []>} : vector<20x48xf32>, vector<48x8xf32>, vector<20x8xf32> -> vector<20x8xf32>
    %122 = arith.addf %118, %121 : vector<20x8xf32>
    %c0_83 = arith.constant 0 : index
    %c0_84 = arith.constant 0 : index
    %123 = vector.load %arg4[%c0_83, %c0_84] : memref<20x1xf32, #tpu.memory_space<vmem>>, vector<20x1xf32>
    %124 = vector.broadcast %123 : vector<20x1xf32> to vector<20x8xf32>
    %125 = arith.addf %122, %124 : vector<20x8xf32>
    %cst_85 = arith.constant 0.000000e+00 : f32
    %126 = vector.broadcast %cst_85 : f32 to vector<20x8xf32>
    %127 = arith.maximumf %125, %126 : vector<20x8xf32>
    %c0_86 = arith.constant 0 : index
    %c0_87 = arith.constant 0 : index
    %128 = vector.load %arg5[%c0_86, %c0_87] : memref<1x20xf32, #tpu.memory_space<vmem>>, vector<1x20xf32>
    %cst_88 = arith.constant dense<0.000000e+00> : vector<1x8xf32>
    %129 = tpu.matmul %128, %127, %cst_88 {dimension_numbers = #tpu.dot_dimension_numbers<[1], [0], [0], [1], [0, 0, 1, 1], [], []>} : vector<1x20xf32>, vector<20x8xf32>, vector<1x8xf32> -> vector<1x8xf32>
    %c0_89 = arith.constant 0 : index
    %c0_90 = arith.constant 0 : index
    %c0_91 = arith.constant 0 : index
    %130 = vector.load %arg2[%c0_89, %c0_90, %c0_91] : memref<1x1x8xf32, #tpu.memory_space<vmem>>, vector<1x1x8xf32>
    %131 = vector.shape_cast %130 : vector<1x1x8xf32> to vector<1x8xf32>
    %c2_92 = arith.constant 2 : index
    %132 = memref.load %arg7[%c2_92] : memref<4xf32, #tpu.memory_space<smem>>
    %133 = vector.broadcast %132 : f32 to vector<1x8xf32>
    %134 = arith.mulf %131, %133 : vector<1x8xf32>
    %135 = arith.addf %129, %134 : vector<1x8xf32>
    %c3_93 = arith.constant 3 : index
    %136 = memref.load %arg7[%c3_93] : memref<4xf32, #tpu.memory_space<smem>>
    %137 = vector.broadcast %136 : f32 to vector<1x8xf32>
    %138 = arith.addf %135, %137 : vector<1x8xf32>
    %cst_94 = arith.constant dense<0xFF800000> : vector<1xf32>
    %139 = vector.multi_reduction <maximumf>, %138, %cst_94 [1] : vector<1x8xf32> to vector<1xf32>
    %140 = vector.shape_cast %139 : vector<1xf32> to vector<1x1xf32>
    %cst_95 = arith.constant 1.000000e+00 : f32
    %141 = vector.broadcast %cst_95 : f32 to vector<1x1xf32>
    %142 = arith.maximumf %140, %141 : vector<1x1xf32>
    %143 = vector.broadcast %142 : vector<1x1xf32> to vector<1x8xf32>
    %144 = arith.subf %138, %143 : vector<1x8xf32>
    %145 = math.exp %144 : vector<1x8xf32>
    %cst_96 = arith.constant 1.000000e+00 : f32
    %146 = vector.broadcast %cst_96 : f32 to vector<1x1xf32>
    %147 = arith.subf %146, %142 : vector<1x1xf32>
    %148 = math.exp %147 : vector<1x1xf32>
    %cst_97 = arith.constant dense<0.000000e+00> : vector<1xf32>
    %149 = vector.multi_reduction <add>, %145, %cst_97 [1] : vector<1x8xf32> to vector<1xf32>
    %150 = vector.shape_cast %149 : vector<1xf32> to vector<1x1xf32>
    %151 = arith.addf %150, %148 : vector<1x1xf32>
    %152 = tpu.reciprocal %151 {approx = true} : vector<1x1xf32> -> vector<1x1xf32>
    %153 = arith.mulf %148, %152 : vector<1x1xf32>
    %c0_98 = arith.constant 0 : index
    %c0_99 = arith.constant 0 : index
    %c0_100 = arith.constant 0 : index
    %154 = vector.load %arg8[%c0_98, %c0_99, %c0_100] : memref<1x1x9xf32, #tpu.memory_space<vmem>>, vector<1x1x1xf32>
    %155 = vector.shape_cast %154 : vector<1x1x1xf32> to vector<1x1xf32>
    %156 = vector.shape_cast %153 : vector<1x1xf32> to vector<1x1x1xf32>
    tpu.vector_store %arg8[%c0_98, %c0_99, %c0_100], %156 {strides = array<i32>} : memref<1x1x9xf32, #tpu.memory_space<vmem>>, vector<1x1x1xf32>,
    %157 = vector.broadcast %152 : vector<1x1xf32> to vector<1x8xf32>
    %158 = arith.mulf %145, %157 : vector<1x8xf32>
    %c0_101 = arith.constant 0 : index
    %c0_102 = arith.constant 0 : index
    %c1_103 = arith.constant 1 : index
    %159 = vector.load %arg8[%c0_101, %c0_102, %c1_103] : memref<1x1x9xf32, #tpu.memory_space<vmem>>, vector<1x1x8xf32>
    %160 = vector.shape_cast %159 : vector<1x1x8xf32> to vector<1x8xf32>
    %161 = vector.shape_cast %158 : vector<1x8xf32> to vector<1x1x8xf32>
    tpu.vector_store %arg8[%c0_101, %c0_102, %c1_103], %161 {strides = array<i32>} : memref<1x1x9xf32, #tpu.memory_space<vmem>>, vector<1x1x8xf32>,
    return
  }
  func.func @transform_0(%arg0: i32) -> (i32, i32, i32, i32) {
    %c0_i32 = arith.constant 0 : i32
    %c0_i32_0 = arith.constant 0 : i32
    %c0_i32_1 = arith.constant 0 : i32
    %c0_i32_2 = arith.constant 0 : i32
    return %arg0, %c0_i32, %c0_i32_0, %c0_i32_1 : i32, i32, i32, i32
  }
  func.func @transform_1(%arg0: i32) -> (i32, i32, i32) {
    %c0_i32 = arith.constant 0 : i32
    %c0_i32_0 = arith.constant 0 : i32
    %c0_i32_1 = arith.constant 0 : i32
    return %arg0, %c0_i32, %c0_i32_0 : i32, i32, i32
  }
  func.func @transform_2(%arg0: i32) -> (i32, i32, i32) {
    %c0_i32 = arith.constant 0 : i32
    %c0_i32_0 = arith.constant 0 : i32
    %c0_i32_1 = arith.constant 0 : i32
    %c0_i32_2 = arith.constant 0 : i32
    return %c0_i32, %c0_i32_0, %c0_i32_1 : i32, i32, i32
  }
  func.func @transform_3(%arg0: i32) -> (i32, i32) {
    %c0_i32 = arith.constant 0 : i32
    %c0_i32_0 = arith.constant 0 : i32
    %c0_i32_1 = arith.constant 0 : i32
    return %c0_i32, %c0_i32_0 : i32, i32
  }
  func.func @transform_4(%arg0: i32) -> (i32, i32) {
    %c0_i32 = arith.constant 0 : i32
    %c0_i32_0 = arith.constant 0 : i32
    %c0_i32_1 = arith.constant 0 : i32
    return %c0_i32, %c0_i32_0 : i32, i32
  }
  func.func @transform_5(%arg0: i32) -> i32 {
    %c0_i32 = arith.constant 0 : i32
    %c0_i32_0 = arith.constant 0 : i32
    return %c0_i32 : i32
  }
  func.func @transform_6(%arg0: i32) -> i32 {
    %c0_i32 = arith.constant 0 : i32
    %c0_i32_0 = arith.constant 0 : i32
    return %c0_i32 : i32
  }
  func.func @transform_7(%arg0: i32) -> (i32, i32, i32) {
    %c0_i32 = arith.constant 0 : i32
    %c0_i32_0 = arith.constant 0 : i32
    %c0_i32_1 = arith.constant 0 : i32
    return %arg0, %c0_i32, %c0_i32_0 : i32, i32, i32
  }
}

</mosaic_0001>

<llo_original>
// kernel: tpu_custom_call.1
$region0: #{tpu_custom_call.1}
  #allocation0 [shape = 'u32[]', space=smem, size = 0x4, offset = 0x4, fixed_abs, tag = 'smem constant byte address 0x4 - core index']
  #allocation1 [shape = 'u32[144,128]{1,0:T(1,128)}', space=vmem, size = 0x12000, scoped, tag = 'internal scratch']
  %s0 = inlined_call_operand.vmem [shape: f32[2,9,48,8], index: 0, kind: input, shape index: {}]
  %s1 = inlined_call_operand.vmem [shape: f32[2,1,8], index: 1, kind: input, shape index: {}]
  %s2 = inlined_call_operand.vmem [shape: f32[2,20,48], index: 2, kind: input, shape index: {}]
  %s3 = inlined_call_operand.vmem [shape: f32[20,1], index: 3, kind: input, shape index: {}]
  %s4 = inlined_call_operand.vmem [shape: f32[1,20], index: 4, kind: input, shape index: {}]
  %s5 = inlined_call_operand.vmem [shape: f32[18], index: 5, kind: input, shape index: {}]
  %s6 = inlined_call_operand.vmem [shape: f32[4], index: 6, kind: input, shape index: {}]
  %s7 = inlined_call_operand.hbm [shape: f32[2,1,9], index: 7, kind: output, shape index: {}]
  %s8 = sld [smem:[#allocation0]]
  $region69: #{tpu_custom_call.1} parent=0
    _
  %s10 = ssub.s32 1, %s8
  %s11 = scalar_select 0, %s10, %s8
  $region1: #{tpu_custom_call.1} parent=0
    #allocation2 [shape = 'u8[512]{0}', space=smem, size = 0x200, scoped, tag = 'input window, operand 5, single buffered']
    #allocation3 [shape = 's32[2]{0}', space=sflag, size = 0x8, scoped, tag = 'scoped memory for tpu_custom_call.1']
    #allocation4 [shape = 's32[2]{0}', space=sflag, size = 0x8, scoped, tag = 'scoped memory for tpu_custom_call.1']
    #allocation5 [shape = 'u8[512]{0}', space=smem, size = 0x200, scoped, tag = 'input window, operand 6, single buffered']
    #allocation6 [shape = 's32[1]{0}', space=sflag, size = 0x4, scoped, tag = 'scoped memory for tpu_custom_call.1']
    #allocation7 [shape = 'u8[1024]{0}', space=vmem, size = 0x400, scoped, tag = 'output window, operand 0']
    %12 = vsyncpa [#allocation4], 0
    %13 = vsyncpa [#allocation6], 0
    %14 = vsyncpa [#allocation3], 0
    %s15 = scalar_lea.sflag [#allocation3], 1
    %16 = vsyncpa %s15, 0
    loop: start=0, step=1, limit=4
    $region2: #{tpu_custom_call.1} parent=1 // loop_pre_header
      _
    $region3: #{tpu_custom_call.1} parent=1 // loop_header
      %s18 = sphi 0, %s22
      %p19 = scmp.ge.s32.totalorder %s18, 4
      %s28 = sphi 0, %s30
      %s31 = sphi 0, %s28
      %s32 = sphi 0, %s31
      %s48 = sphi 0, %s32
      %s54 = sphi 0, %s56
      %s57 = sphi 0, %s54
      %s58 = sphi 0, %s57
      %s74 = sphi 0, %s58
      %s78 = sphi 0, %s78
      %s80 = sphi 0, %s78
      %s81 = sphi 0, %s80
      %s95 = sphi 0, %s81
      %s99 = sphi 0, %s99
      %s101 = sphi 0, %s99
      %s102 = sphi 0, %s101
      %s116 = sphi 0, %s102
      %s120 = sphi 0, %s120
      %s122 = sphi 0, %s120
      %s123 = sphi 0, %s122
      %s137 = sphi 0, %s123
      %s141 = sphi 0, %s141
      %s143 = sphi 0, %s141
      %s144 = sphi 0, %s143
      %s158 = sphi 0, %s144
      %s162 = sphi 0, %s162
      %s164 = sphi 0, %s162
      %s165 = sphi 0, %s164
      %s179 = sphi 0, %s165
      %s185 = sphi 0, %s187
      %s188 = sphi 0, %s185
      %s189 = sphi 0, %s188
      %s205 = sphi 0, %s189
    $region4: #{tpu_custom_call.1} parent=1 // loop_header_branch
      %21 = sbr.rel (%p19) target = $region8
    $region5: #{tpu_custom_call.1} parent=1 // loop_body
      %s23 = ssub.s32 %s18, 1
      %s24 = ssub.s32 %s18, 2
      %s25 = sadd.s32 %s18, 1
      %s26 = ssub.s32 %s18, %s25
      %p27 = scmp.eq.s32.totalorder %s26, 0
      %s29 = sadd.s32 %s28, 1
      %s30 = scalar_select %p27, %s28, %s29
      %p33 = pneg %p27
      %p34 = scmp.eq.s32.totalorder %s18, 1
      %p35 = por %p33, %p34
      %p36 = scmp.ne.s32.totalorder %s28, %s31
      %p37 = scmp.eq.s32.totalorder %s18, 0
      %p38 = por %p36, %p37
      %p39 = scmp.ne.s32.totalorder %s28, %s31
      %p40 = scmp.eq.s32.totalorder %s23, 1
      %p41 = por %p39, %p40
      %p42 = scmp.ne.s32.totalorder %s31, %s32
      %p43 = scmp.eq.s32.totalorder %s23, 0
      %p44 = por %p42, %p43
      %p45 = scmp.ne.s32.totalorder %s31, %s32
      %p46 = scmp.eq.s32.totalorder %s24, 1
      %p47 = por %p45, %p46
      %p49 = scmp.ne.s32.totalorder %s32, %s48
      %p50 = scmp.eq.s32.totalorder %s24, 0
      %p51 = por %p49, %p50
      %s52 = ssub.s32 %s18, %s25
      %p53 = scmp.eq.s32.totalorder %s52, 0
      %s55 = sadd.s32 %s54, 1
      %s56 = scalar_select %p53, %s54, %s55
      %p59 = pneg %p53
      %p60 = scmp.eq.s32.totalorder %s18, 1
      %p61 = por %p59, %p60
      %p62 = scmp.ne.s32.totalorder %s54, %s57
      %p63 = scmp.eq.s32.totalorder %s18, 0
      %p64 = por %p62, %p63
      %p65 = scmp.ne.s32.totalorder %s54, %s57
      %p66 = scmp.eq.s32.totalorder %s23, 1
      %p67 = por %p65, %p66
      %p68 = scmp.ne.s32.totalorder %s57, %s58
      %p69 = scmp.eq.s32.totalorder %s23, 0
      %p70 = por %p68, %p69
      %p71 = scmp.ne.s32.totalorder %s57, %s58
      %p72 = scmp.eq.s32.totalorder %s24, 1
      %p73 = por %p71, %p72
      %p75 = scmp.ne.s32.totalorder %s58, %s74
      %p76 = scmp.eq.s32.totalorder %s24, 0
      %p77 = por %p75, %p76
      %s79 = sadd.s32 %s78, 1
      %p82 = scmp.eq.s32.totalorder %s18, 1
      %p83 = scmp.ne.s32.totalorder %s78, %s80
      %p84 = scmp.eq.s32.totalorder %s18, 0
      %p85 = por %p83, %p84
      %p86 = scmp.ne.s32.totalorder %s78, %s80
      %p87 = scmp.eq.s32.totalorder %s23, 1
      %p88 = por %p86, %p87
      %p89 = scmp.ne.s32.totalorder %s80, %s81
      %p90 = scmp.eq.s32.totalorder %s23, 0
      %p91 = por %p89, %p90
      %p92 = scmp.ne.s32.totalorder %s80, %s81
      %p93 = scmp.eq.s32.totalorder %s24, 1
      %p94 = por %p92, %p93
      %p96 = scmp.ne.s32.totalorder %s81, %s95
      %p97 = scmp.eq.s32.totalorder %s24, 0
      %p98 = por %p96, %p97
      %s100 = sadd.s32 %s99, 1
      %p103 = scmp.eq.s32.totalorder %s18, 1
      %p104 = scmp.ne.s32.totalorder %s99, %s101
      %p105 = scmp.eq.s32.totalorder %s18, 0
      %p106 = por %p104, %p105
      %p107 = scmp.ne.s32.totalorder %s99, %s101
      %p108 = scmp.eq.s32.totalorder %s23, 1
      %p109 = por %p107, %p108
      %p110 = scmp.ne.s32.totalorder %s101, %s102
      %p111 = scmp.eq.s32.totalorder %s23, 0
      %p112 = por %p110, %p111
      %p113 = scmp.ne.s32.totalorder %s101, %s102
      %p114 = scmp.eq.s32.totalorder %s24, 1
      %p115 = por %p113, %p114
      %p117 = scmp.ne.s32.totalorder %s102, %s116
      %p118 = scmp.eq.s32.totalorder %s24, 0
      %p119 = por %p117, %p118
      %s121 = sadd.s32 %s120, 1
      %p124 = scmp.eq.s32.totalorder %s18, 1
      %p125 = scmp.ne.s32.totalorder %s120, %s122
      %p126 = scmp.eq.s32.totalorder %s18, 0
      %p127 = por %p125, %p126
      %p128 = scmp.ne.s32.totalorder %s120, %s122
      %p129 = scmp.eq.s32.totalorder %s23, 1
      %p130 = por %p128, %p129
      %p131 = scmp.ne.s32.totalorder %s122, %s123
      %p132 = scmp.eq.s32.totalorder %s23, 0
      %p133 = por %p131, %p132
      %p134 = scmp.ne.s32.totalorder %s122, %s123
      %p135 = scmp.eq.s32.totalorder %s24, 1
      %p136 = por %p134, %p135
      %p138 = scmp.ne.s32.totalorder %s123, %s137
      %p139 = scmp.eq.s32.totalorder %s24, 0
      %p140 = por %p138, %p139
      %s142 = sadd.s32 %s141, 1
      %p145 = scmp.eq.s32.totalorder %s18, 1
      %p146 = scmp.ne.s32.totalorder %s141, %s143
      %p147 = scmp.eq.s32.totalorder %s18, 0
      %p148 = por %p146, %p147
      %p149 = scmp.ne.s32.totalorder %s141, %s143
      %p150 = scmp.eq.s32.totalorder %s23, 1
      %p151 = por %p149, %p150
      %p152 = scmp.ne.s32.totalorder %s143, %s144
      %p153 = scmp.eq.s32.totalorder %s23, 0
      %p154 = por %p152, %p153
      %p155 = scmp.ne.s32.totalorder %s143, %s144
      %p156 = scmp.eq.s32.totalorder %s24, 1
      %p157 = por %p155, %p156
      %p159 = scmp.ne.s32.totalorder %s144, %s158
      %p160 = scmp.eq.s32.totalorder %s24, 0
      %p161 = por %p159, %p160
      %s163 = sadd.s32 %s162, 1
      %p166 = scmp.eq.s32.totalorder %s18, 1
      %p167 = scmp.ne.s32.totalorder %s162, %s164
      %p168 = scmp.eq.s32.totalorder %s18, 0
      %p169 = por %p167, %p168
      %p170 = scmp.ne.s32.totalorder %s162, %s164
      %p171 = scmp.eq.s32.totalorder %s23, 1
      %p172 = por %p170, %p171
      %p173 = scmp.ne.s32.totalorder %s164, %s165
      %p174 = scmp.eq.s32.totalorder %s23, 0
      %p175 = por %p173, %p174
      %p176 = scmp.ne.s32.totalorder %s164, %s165
      %p177 = scmp.eq.s32.totalorder %s24, 1
      %p178 = por %p176, %p177
      %p180 = scmp.ne.s32.totalorder %s165, %s179
      %p181 = scmp.eq.s32.totalorder %s24, 0
      %p182 = por %p180, %p181
      %s183 = ssub.s32 %s18, %s25
      %p184 = scmp.eq.s32.totalorder %s183, 0
      %s186 = sadd.s32 %s185, 1
      %s187 = scalar_select %p184, %s185, %s186
      %p190 = pneg %p184
      %p191 = scmp.eq.s32.totalorder %s18, 1
      %p192 = por %p190, %p191
      %p193 = scmp.ne.s32.totalorder %s185, %s188
      %p194 = scmp.eq.s32.totalorder %s18, 0
      %p195 = por %p193, %p194
      %p196 = scmp.ne.s32.totalorder %s185, %s188
      %p197 = scmp.eq.s32.totalorder %s23, 1
      %p198 = por %p196, %p197
      %p199 = scmp.ne.s32.totalorder %s188, %s189
      %p200 = scmp.eq.s32.totalorder %s23, 0
      %p201 = por %p199, %p200
      %p202 = scmp.ne.s32.totalorder %s188, %s189
      %p203 = scmp.eq.s32.totalorder %s24, 1
      %p204 = por %p202, %p203
      %p206 = scmp.ne.s32.totalorder %s189, %s205
      %p207 = scmp.eq.s32.totalorder %s24, 0
      %p208 = por %p206, %p207
      %p209 = scmp.le.s32.totalorder 1, %s18
      %p210 = scmp.lt.s32.totalorder %s18, 3
      %p211 = pnand %p209, %p210
      %p212 = pneg %p211
      // Predicated region
      $region9: #{tpu_custom_call.1} parent=5 // pred_check
        _
      $region10: #{tpu_custom_call.1} parent=5 // pred_check_branch
        %214 = sbr.rel (%p211) target = $region12
      $region11: #{tpu_custom_call.1} parent=5 // pred_region
        %s215 = ssub.s32 %s18, 1
        // Predicated region
        $region13: #{tpu_custom_call.1} parent=11 // pred_check
          %p216 = pneg %p91
        $region14: #{tpu_custom_call.1} parent=11 // pred_check_branch
          %218 = sbr.rel (%p216) target = $region16
        $region15: #{tpu_custom_call.1} parent=11 // pred_region
          _
        $region16: #{tpu_custom_call.1} parent=11 // pred_fallthru
          _
        // Predicated region
        $region17: #{tpu_custom_call.1} parent=11 // pred_check
          %p219 = pneg %p112
        $region18: #{tpu_custom_call.1} parent=11 // pred_check_branch
          %221 = sbr.rel (%p219) target = $region20
        $region19: #{tpu_custom_call.1} parent=11 // pred_region
          _
        $region20: #{tpu_custom_call.1} parent=11 // pred_fallthru
          _
        // Predicated region
        $region21: #{tpu_custom_call.1} parent=11 // pred_check
          %p222 = pneg %p133
        $region22: #{tpu_custom_call.1} parent=11 // pred_check_branch
          %224 = sbr.rel (%p222) target = $region24
        $region23: #{tpu_custom_call.1} parent=11 // pred_region
          _
        $region24: #{tpu_custom_call.1} parent=11 // pred_fallthru
          _
        // Predicated region
        $region25: #{tpu_custom_call.1} parent=11 // pred_check
          %p225 = pneg %p154
        $region26: #{tpu_custom_call.1} parent=11 // pred_check_branch
          %227 = sbr.rel (%p225) target = $region28
        $region27: #{tpu_custom_call.1} parent=11 // pred_region
          %s229 = ssub.s32 16, 16
          %230 = vsyncadd [#allocation4], %s229
          %s232 = sshll.u32 %s5, 4
          %s233 = int_to_ptr.vmem [resolvable:$true] %s232
          %235 = dma.vmem_to_smem %s233, 16, [#allocation2], [#allocation4]
        $region28: #{tpu_custom_call.1} parent=11 // pred_fallthru
          _
        // Predicated region
        $region29: #{tpu_custom_call.1} parent=11 // pred_check
          %p236 = pneg %p175
        $region30: #{tpu_custom_call.1} parent=11 // pred_check_branch
          %238 = sbr.rel (%p236) target = $region32
        $region31: #{tpu_custom_call.1} parent=11 // pred_region
          %s240 = ssub.s32 16, 16
          %241 = vsyncadd [#allocation6], %s240
          %s243 = sshll.u32 %s6, 4
          %s244 = int_to_ptr.vmem [resolvable:$true] %s243
          %246 = dma.vmem_to_smem %s244, 16, [#allocation5], [#allocation6]
        $region32: #{tpu_custom_call.1} parent=11 // pred_fallthru
          _
      $region12: #{tpu_custom_call.1} parent=5 // pred_fallthru
        _
      %p247 = scmp.lt.s32.totalorder %s18, 2
      // Predicated region
      $region33: #{tpu_custom_call.1} parent=5 // pred_check
        %p248 = pneg %p247
      $region34: #{tpu_custom_call.1} parent=5 // pred_check_branch
        %250 = sbr.rel (%p248) target = $region36
      $region35: #{tpu_custom_call.1} parent=5 // pred_region
        // Predicated region
        $region37: #{tpu_custom_call.1} parent=35 // pred_check
          %p251 = pneg %p38
        $region38: #{tpu_custom_call.1} parent=35 // pred_check_branch
          %253 = sbr.rel (%p251) target = $region40
        $region39: #{tpu_custom_call.1} parent=35 // pred_region
          %p254 = scmp.lt.s32.totalorder %s18, 1
          %s255 = scalar_select %p254, %s18, 1
          %s256 = smul.addr %s255, 54
          %s257 = smul.addr %s256, 8
          %s258 = scalar_lea.vmem %s0, %s257
        $region40: #{tpu_custom_call.1} parent=35 // pred_fallthru
          _
        // Predicated region
        $region41: #{tpu_custom_call.1} parent=35 // pred_check
          %p259 = pneg %p64
        $region42: #{tpu_custom_call.1} parent=35 // pred_check_branch
          %261 = sbr.rel (%p259) target = $region44
        $region43: #{tpu_custom_call.1} parent=35 // pred_region
          %p262 = scmp.lt.s32.totalorder %s18, 1
          %s263 = scalar_select %p262, %s18, 1
          %s264 = scalar_lea.vmem %s1, %s263
        $region44: #{tpu_custom_call.1} parent=35 // pred_fallthru
          _
      $region36: #{tpu_custom_call.1} parent=5 // pred_fallthru
        _
      %p265 = scmp.le.s32.totalorder 1, %s18
      %p266 = scmp.lt.s32.totalorder %s18, 3
      %p267 = pnand %p265, %p266
      %p268 = pneg %p267
      // Predicated region
      $region45: #{tpu_custom_call.1} parent=5 // pred_check
        _
      $region46: #{tpu_custom_call.1} parent=5 // pred_check_branch
        %270 = sbr.rel (%p267) target = $region48
      $region47: #{tpu_custom_call.1} parent=5 // pred_region
        %s271 = ssub.s32 %s18, 1
        // Predicated region
        $region49: #{tpu_custom_call.1} parent=47 // pred_check
          %p272 = pneg %p154
        $region50: #{tpu_custom_call.1} parent=47 // pred_check_branch
          %274 = sbr.rel (%p272) target = $region52
        $region51: #{tpu_custom_call.1} parent=47 // pred_region
          %275 = dma.done [#allocation4], 16
        $region52: #{tpu_custom_call.1} parent=47 // pred_fallthru
          _
        // Predicated region
        $region53: #{tpu_custom_call.1} parent=47 // pred_check
          %p276 = pneg %p175
        $region54: #{tpu_custom_call.1} parent=47 // pred_check_branch
          %278 = sbr.rel (%p276) target = $region56
        $region55: #{tpu_custom_call.1} parent=47 // pred_region
          %279 = dma.done [#allocation6], 16
        $region56: #{tpu_custom_call.1} parent=47 // pred_fallthru
          _
        %280 = sfence
        %p281 = scmp.lt.s32.totalorder %s23, 1
        %s282 = scalar_select %p281, %s23, 1
        %s283 = smul.addr %s282, 54
        %s284 = smul.addr %s283, 8
        %s285 = scalar_lea.vmem %s0, %s284
        %p286 = pneg %p44
        %p287 = pneg %p41
        %p288 = scmp.lt.s32.totalorder %s23, 1
        %s289 = scalar_select %p288, %s23, 1
        %s290 = scalar_lea.vmem %s1, %s289
        %p291 = pneg %p70
        %p292 = pneg %p67
        %p293 = pneg %p91
        %p294 = pneg %p88
        %p295 = pneg %p112
        %p296 = pneg %p109
        %p297 = pneg %p133
        %p298 = pneg %p130
        %p299 = pneg %p154
        %p300 = pneg %p151
        %p301 = pneg %p175
        %p302 = pneg %p172
        %p303 = pneg %p201
        %p304 = pneg %p198
        %s305 = sand.u32 %s188, 1
        %s306 = scalar_lea.sflag [#allocation3], %s305
        %s307 = sand.u32 %s188, 1
        %s308 = scalar_lea.vmem [#allocation7], %s307
        %p309 = scmp.lt.s32.totalorder %s23, 1
        %s310 = scalar_select %p309, %s23, 1
        %s311 = smul.addr %s310, 54
        %s312 = smul.addr %s311, 8
        %s313 = scalar_lea.vmem %s0, %s312
        %p314 = scmp.lt.s32.totalorder %s23, 1
        %s315 = scalar_select %p314, %s23, 1
        %s316 = scalar_lea.vmem %s1, %s315
        %v317 = vld [vmem:[%s313] sm:$0xff]
        %v318 = vld [vmem:[%s313 + $0x8] sm:$0xff]
        %v319 = vld [vmem:[%s313 + $0x10] sm:$0xff]
        %v320 = vld [vmem:[%s313 + $0x18] sm:$0xff]
        %v321 = vld [vmem:[%s313 + $0x20] sm:$0xff]
        %v322 = vld [vmem:[%s313 + $0x28] sm:$0xff]
        %s323 = sld [smem:[#allocation2]]
        %v324 = vstv %s323
        %v325 = vmul.f32 %v317, %v324
        %v326 = vmul.f32 %v318, %v324
        %v327 = vmul.f32 %v319, %v324
        %v328 = vmul.f32 %v320, %v324
        %v329 = vmul.f32 %v321, %v324
        %v330 = vmul.f32 %v322, %v324
        %s331 = scalar_lea.vmem %s313, 48
        %v332 = vld [vmem:[%s331] sm:$0xff]
        %v333 = vld [vmem:[%s331 + $0x8] sm:$0xff]
        %v334 = vld [vmem:[%s331 + $0x10] sm:$0xff]
        %v335 = vld [vmem:[%s331 + $0x18] sm:$0xff]
        %v336 = vld [vmem:[%s331 + $0x20] sm:$0xff]
        %v337 = vld [vmem:[%s331 + $0x28] sm:$0xff]
        %s338 = sld [smem:[#allocation2 + $0x1]]
        %v339 = vstv %s338
        %v340 = vmul.f32 %v332, %v339
        %v341 = vmul.f32 %v333, %v339
        %v342 = vmul.f32 %v334, %v339
        %v343 = vmul.f32 %v335, %v339
        %v344 = vmul.f32 %v336, %v339
        %v345 = vmul.f32 %v337, %v339
        %v346 = vadd.f32 %v325, %v340
        %v347 = vadd.f32 %v326, %v341
        %v348 = vadd.f32 %v327, %v342
        %v349 = vadd.f32 %v328, %v343
        %v350 = vadd.f32 %v329, %v344
        %v351 = vadd.f32 %v330, %v345
        %s352 = scalar_lea.vmem %s313, 96
        %v353 = vld [vmem:[%s352] sm:$0xff]
        %v354 = vld [vmem:[%s352 + $0x8] sm:$0xff]
        %v355 = vld [vmem:[%s352 + $0x10] sm:$0xff]
        %v356 = vld [vmem:[%s352 + $0x18] sm:$0xff]
        %v357 = vld [vmem:[%s352 + $0x20] sm:$0xff]
        %v358 = vld [vmem:[%s352 + $0x28] sm:$0xff]
        %s359 = sld [smem:[#allocation2 + $0x2]]
        %v360 = vstv %s359
        %v361 = vmul.f32 %v353, %v360
        %v362 = vmul.f32 %v354, %v360
        %v363 = vmul.f32 %v355, %v360
        %v364 = vmul.f32 %v356, %v360
        %v365 = vmul.f32 %v357, %v360
        %v366 = vmul.f32 %v358, %v360
        %v367 = vadd.f32 %v346, %v361
        %v368 = vadd.f32 %v347, %v362
        %v369 = vadd.f32 %v348, %v363
        %v370 = vadd.f32 %v349, %v364
        %v371 = vadd.f32 %v350, %v365
        %v372 = vadd.f32 %v351, %v366
        %s373 = scalar_lea.vmem %s313, 144
        %v374 = vld [vmem:[%s373] sm:$0xff]
        %v375 = vld [vmem:[%s373 + $0x8] sm:$0xff]
        %v376 = vld [vmem:[%s373 + $0x10] sm:$0xff]
        %v377 = vld [vmem:[%s373 + $0x18] sm:$0xff]
        %v378 = vld [vmem:[%s373 + $0x20] sm:$0xff]
        %v379 = vld [vmem:[%s373 + $0x28] sm:$0xff]
        %s380 = sld [smem:[#allocation2 + $0x3]]
        %v381 = vstv %s380
        %v382 = vmul.f32 %v374, %v381
        %v383 = vmul.f32 %v375, %v381
        %v384 = vmul.f32 %v376, %v381
        %v385 = vmul.f32 %v377, %v381
        %v386 = vmul.f32 %v378, %v381
        %v387 = vmul.f32 %v379, %v381
        %v388 = vadd.f32 %v367, %v382
        %v389 = vadd.f32 %v368, %v383
        %v390 = vadd.f32 %v369, %v384
        %v391 = vadd.f32 %v370, %v385
        %v392 = vadd.f32 %v371, %v386
        %v393 = vadd.f32 %v372, %v387
        %s394 = scalar_lea.vmem %s313, 192
        %v395 = vld [vmem:[%s394] sm:$0xff]
        %v396 = vld [vmem:[%s394 + $0x8] sm:$0xff]
        %v397 = vld [vmem:[%s394 + $0x10] sm:$0xff]
        %v398 = vld [vmem:[%s394 + $0x18] sm:$0xff]
        %v399 = vld [vmem:[%s394 + $0x20] sm:$0xff]
        %v400 = vld [vmem:[%s394 + $0x28] sm:$0xff]
        %s401 = sld [smem:[#allocation2 + $0x4]]
        %v402 = vstv %s401
        %v403 = vmul.f32 %v395, %v402
        %v404 = vmul.f32 %v396, %v402
        %v405 = vmul.f32 %v397, %v402
        %v406 = vmul.f32 %v398, %v402
        %v407 = vmul.f32 %v399, %v402
        %v408 = vmul.f32 %v400, %v402
        %v409 = vadd.f32 %v388, %v403
        %v410 = vadd.f32 %v389, %v404
        %v411 = vadd.f32 %v390, %v405
        %v412 = vadd.f32 %v391, %v406
        %v413 = vadd.f32 %v392, %v407
        %v414 = vadd.f32 %v393, %v408
        %s415 = scalar_lea.vmem %s313, 240
        %v416 = vld [vmem:[%s415] sm:$0xff]
        %v417 = vld [vmem:[%s415 + $0x8] sm:$0xff]
        %v418 = vld [vmem:[%s415 + $0x10] sm:$0xff]
        %v419 = vld [vmem:[%s415 + $0x18] sm:$0xff]
        %v420 = vld [vmem:[%s415 + $0x20] sm:$0xff]
        %v421 = vld [vmem:[%s415 + $0x28] sm:$0xff]
        %s422 = sld [smem:[#allocation2 + $0x5]]
        %v423 = vstv %s422
        %v424 = vmul.f32 %v416, %v423
        %v425 = vmul.f32 %v417, %v423
        %v426 = vmul.f32 %v418, %v423
        %v427 = vmul.f32 %v419, %v423
        %v428 = vmul.f32 %v420, %v423
        %v429 = vmul.f32 %v421, %v423
        %v430 = vadd.f32 %v409, %v424
        %v431 = vadd.f32 %v410, %v425
        %v432 = vadd.f32 %v411, %v426
        %v433 = vadd.f32 %v412, %v427
        %v434 = vadd.f32 %v413, %v428
        %v435 = vadd.f32 %v414, %v429
        %s436 = scalar_lea.vmem %s313, 288
        %v437 = vld [vmem:[%s436] sm:$0xff]
        %v438 = vld [vmem:[%s436 + $0x8] sm:$0xff]
        %v439 = vld [vmem:[%s436 + $0x10] sm:$0xff]
        %v440 = vld [vmem:[%s436 + $0x18] sm:$0xff]
        %v441 = vld [vmem:[%s436 + $0x20] sm:$0xff]
        %v442 = vld [vmem:[%s436 + $0x28] sm:$0xff]
        %s443 = sld [smem:[#allocation2 + $0x6]]
        %v444 = vstv %s443
        %v445 = vmul.f32 %v437, %v444
        %v446 = vmul.f32 %v438, %v444
        %v447 = vmul.f32 %v439, %v444
        %v448 = vmul.f32 %v440, %v444
        %v449 = vmul.f32 %v441, %v444
        %v450 = vmul.f32 %v442, %v444
        %v451 = vadd.f32 %v430, %v445
        %v452 = vadd.f32 %v431, %v446
        %v453 = vadd.f32 %v432, %v447
        %v454 = vadd.f32 %v433, %v448
        %v455 = vadd.f32 %v434, %v449
        %v456 = vadd.f32 %v435, %v450
        %s457 = scalar_lea.vmem %s313, 336
        %v458 = vld [vmem:[%s457] sm:$0xff]
        %v459 = vld [vmem:[%s457 + $0x8] sm:$0xff]
        %v460 = vld [vmem:[%s457 + $0x10] sm:$0xff]
        %v461 = vld [vmem:[%s457 + $0x18] sm:$0xff]
        %v462 = vld [vmem:[%s457 + $0x20] sm:$0xff]
        %v463 = vld [vmem:[%s457 + $0x28] sm:$0xff]
        %s464 = sld [smem:[#allocation2 + $0x7]]
        %v465 = vstv %s464
        %v466 = vmul.f32 %v458, %v465
        %v467 = vmul.f32 %v459, %v465
        %v468 = vmul.f32 %v460, %v465
        %v469 = vmul.f32 %v461, %v465
        %v470 = vmul.f32 %v462, %v465
        %v471 = vmul.f32 %v463, %v465
        %v472 = vadd.f32 %v451, %v466
        %v473 = vadd.f32 %v452, %v467
        %v474 = vadd.f32 %v453, %v468
        %v475 = vadd.f32 %v454, %v469
        %v476 = vadd.f32 %v455, %v470
        %v477 = vadd.f32 %v456, %v471
        %s478 = scalar_lea.vmem %s313, 384
        %v479 = vld [vmem:[%s478] sm:$0xff]
        %v480 = vld [vmem:[%s478 + $0x8] sm:$0xff]
        %v481 = vld [vmem:[%s478 + $0x10] sm:$0xff]
        %v482 = vld [vmem:[%s478 + $0x18] sm:$0xff]
        %v483 = vld [vmem:[%s478 + $0x20] sm:$0xff]
        %v484 = vld [vmem:[%s478 + $0x28] sm:$0xff]
        %s485 = sld [smem:[#allocation2 + $0x8]]
        %v486 = vstv %s485
        %v487 = vmul.f32 %v479, %v486
        %v488 = vmul.f32 %v480, %v486
        %v489 = vmul.f32 %v481, %v486
        %v490 = vmul.f32 %v482, %v486
        %v491 = vmul.f32 %v483, %v486
        %v492 = vmul.f32 %v484, %v486
        %v493 = vadd.f32 %v472, %v487
        %v494 = vadd.f32 %v473, %v488
        %v495 = vadd.f32 %v474, %v489
        %v496 = vadd.f32 %v475, %v490
        %v497 = vadd.f32 %v476, %v491
        %v498 = vadd.f32 %v477, %v492
        %s499 = sld [smem:[#allocation5]]
        %v500 = vstv %s499
        %v501 = vadd.f32 %v493, %v500
        %v502 = vadd.f32 %v494, %v500
        %v503 = vadd.f32 %v495, %v500
        %v504 = vadd.f32 %v496, %v500
        %v505 = vadd.f32 %v497, %v500
        %v506 = vadd.f32 %v498, %v500
        %v507 = vmax.f32 %v501, 0.0
        %v508 = vmax.f32 %v502, 0.0
        %v509 = vmax.f32 %v503, 0.0
        %v510 = vmax.f32 %v504, 0.0
        %v511 = vmax.f32 %v505, 0.0
        %v512 = vmax.f32 %v506, 0.0
        %s513 = sld [smem:[#allocation2 + $0x9]]
        %v514 = vstv %s513
        %v515 = vmul.f32 %v317, %v514
        %v516 = vmul.f32 %v318, %v514
        %v517 = vmul.f32 %v319, %v514
        %v518 = vmul.f32 %v320, %v514
        %v519 = vmul.f32 %v321, %v514
        %v520 = vmul.f32 %v322, %v514
        %s521 = sld [smem:[#allocation2 + $0xa]]
        %v522 = vstv %s521
        %v523 = vmul.f32 %v332, %v522
        %v524 = vmul.f32 %v333, %v522
        %v525 = vmul.f32 %v334, %v522
        %v526 = vmul.f32 %v335, %v522
        %v527 = vmul.f32 %v336, %v522
        %v528 = vmul.f32 %v337, %v522
        %v529 = vadd.f32 %v515, %v523
        %v530 = vadd.f32 %v516, %v524
        %v531 = vadd.f32 %v517, %v525
        %v532 = vadd.f32 %v518, %v526
        %v533 = vadd.f32 %v519, %v527
        %v534 = vadd.f32 %v520, %v528
        %s535 = sld [smem:[#allocation2 + $0xb]]
        %v536 = vstv %s535
        %v537 = vmul.f32 %v353, %v536
        %v538 = vmul.f32 %v354, %v536
        %v539 = vmul.f32 %v355, %v536
        %v540 = vmul.f32 %v356, %v536
        %v541 = vmul.f32 %v357, %v536
        %v542 = vmul.f32 %v358, %v536
        %v543 = vadd.f32 %v529, %v537
        %v544 = vadd.f32 %v530, %v538
        %v545 = vadd.f32 %v531, %v539
        %v546 = vadd.f32 %v532, %v540
        %v547 = vadd.f32 %v533, %v541
        %v548 = vadd.f32 %v534, %v542
        %s549 = sld [smem:[#allocation2 + $0xc]]
        %v550 = vstv %s549
        %v551 = vmul.f32 %v374, %v550
        %v552 = vmul.f32 %v375, %v550
        %v553 = vmul.f32 %v376, %v550
        %v554 = vmul.f32 %v377, %v550
        %v555 = vmul.f32 %v378, %v550
        %v556 = vmul.f32 %v379, %v550
        %v557 = vadd.f32 %v543, %v551
        %v558 = vadd.f32 %v544, %v552
        %v559 = vadd.f32 %v545, %v553
        %v560 = vadd.f32 %v546, %v554
        %v561 = vadd.f32 %v547, %v555
        %v562 = vadd.f32 %v548, %v556
        %s563 = sld [smem:[#allocation2 + $0xd]]
        %v564 = vstv %s563
        %v565 = vmul.f32 %v395, %v564
        %v566 = vmul.f32 %v396, %v564
        %v567 = vmul.f32 %v397, %v564
        %v568 = vmul.f32 %v398, %v564
        %v569 = vmul.f32 %v399, %v564
        %v570 = vmul.f32 %v400, %v564
        %v571 = vadd.f32 %v557, %v565
        %v572 = vadd.f32 %v558, %v566
        %v573 = vadd.f32 %v559, %v567
        %v574 = vadd.f32 %v560, %v568
        %v575 = vadd.f32 %v561, %v569
        %v576 = vadd.f32 %v562, %v570
        %s577 = sld [smem:[#allocation2 + $0xe]]
        %v578 = vstv %s577
        %v579 = vmul.f32 %v416, %v578
        %v580 = vmul.f32 %v417, %v578
        %v581 = vmul.f32 %v418, %v578
        %v582 = vmul.f32 %v419, %v578
        %v583 = vmul.f32 %v420, %v578
        %v584 = vmul.f32 %v421, %v578
        %v585 = vadd.f32 %v571, %v579
        %v586 = vadd.f32 %v572, %v580
        %v587 = vadd.f32 %v573, %v581
        %v588 = vadd.f32 %v574, %v582
        %v589 = vadd.f32 %v575, %v583
        %v590 = vadd.f32 %v576, %v584
        %s591 = sld [smem:[#allocation2 + $0xf]]
        %v592 = vstv %s591
        %v593 = vmul.f32 %v437, %v592
        %v594 = vmul.f32 %v438, %v592
        %v595 = vmul.f32 %v439, %v592
        %v596 = vmul.f32 %v440, %v592
        %v597 = vmul.f32 %v441, %v592
        %v598 = vmul.f32 %v442, %v592
        %v599 = vadd.f32 %v585, %v593
        %v600 = vadd.f32 %v586, %v594
        %v601 = vadd.f32 %v587, %v595
        %v602 = vadd.f32 %v588, %v596
        %v603 = vadd.f32 %v589, %v597
        %v604 = vadd.f32 %v590, %v598
        %s605 = sld [smem:[#allocation2 + $0x10]]
        %v606 = vstv %s605
        %v607 = vmul.f32 %v458, %v606
        %v608 = vmul.f32 %v459, %v606
        %v609 = vmul.f32 %v460, %v606
        %v610 = vmul.f32 %v461, %v606
        %v611 = vmul.f32 %v462, %v606
        %v612 = vmul.f32 %v463, %v606
        %v613 = vadd.f32 %v599, %v607
        %v614 = vadd.f32 %v600, %v608
        %v615 = vadd.f32 %v601, %v609
        %v616 = vadd.f32 %v602, %v610
        %v617 = vadd.f32 %v603, %v611
        %v618 = vadd.f32 %v604, %v612
        %s619 = sld [smem:[#allocation2 + $0x11]]
        %v620 = vstv %s619
        %v621 = vmul.f32 %v479, %v620
        %v622 = vmul.f32 %v480, %v620
        %v623 = vmul.f32 %v481, %v620
        %v624 = vmul.f32 %v482, %v620
        %v625 = vmul.f32 %v483, %v620
        %v626 = vmul.f32 %v484, %v620
        %v627 = vadd.f32 %v613, %v621
        %v628 = vadd.f32 %v614, %v622
        %v629 = vadd.f32 %v615, %v623
        %v630 = vadd.f32 %v616, %v624
        %v631 = vadd.f32 %v617, %v625
        %v632 = vadd.f32 %v618, %v626
        %s633 = sld [smem:[#allocation5 + $0x1]]
        %v634 = vstv %s633
        %v635 = vadd.f32 %v627, %v634
        %v636 = vadd.f32 %v628, %v634
        %v637 = vadd.f32 %v629, %v634
        %v638 = vadd.f32 %v630, %v634
        %v639 = vadd.f32 %v631, %v634
        %v640 = vadd.f32 %v632, %v634
        %v641 = vmax.f32 %v635, 0.0
        %v642 = vmax.f32 %v636, 0.0
        %v643 = vmax.f32 %v637, 0.0
        %v644 = vmax.f32 %v638, 0.0
        %v645 = vmax.f32 %v639, 0.0
        %v646 = vmax.f32 %v640, 0.0
        %v647 = vld [vmem:[%s2] sm:$0xff]
        %v648 = vld [vmem:[%s2 + $0x8] sm:$0xff]
        %v649 = vld [vmem:[%s2 + $0x10] sm:$0xf]
        %s650 = scalar_lea.vmem %s2, 24
        %v651 = vld [vmem:[%s650] sm:$0xff]
        %v652 = vld [vmem:[%s650 + $0x8] sm:$0xff]
        %v653 = vld [vmem:[%s650 + $0x10] sm:$0xf]
        %vm654 = vcmask 392192
        %v656 = vsel %vm654, %v651, 0
        %v659 = vsel %vm654, %v652, 0
        %v662 = vsel %vm654, %v653, 0
        %664 = vmatprep.subr.mxu0 0.0
        %665 = vmatpush1.msra.mxu0 %v641
        %666 = vmatprep.subr.mxu0 0.0
        %667 = vmatpush1.msra.mxu0 %v642
        %668 = vmatprep.subr.mxu0 0.0
        %669 = vmatpush1.msra.mxu0 %v643
        %670 = vmatprep.subr.mxu0 0.0
        %671 = vmatpush1.msra.mxu0 %v644
        %672 = vmatprep.subr.mxu0 0.0
        %673 = vmatpush1.msra.mxu0 %v645
        %674 = vmatprep.subr.mxu0 0.0
        %675 = vmatpush1.msra.mxu0 %v646
        %676 = vmatprep.subr.mxu0 0.0
        %677 = vmatpush1.msra.mxu0 0.0
        %678 = vmatprep.subr.mxu0 0.0
        %679 = vmatpush1.msra.mxu0 0.0
        %680 = vmatprep.subr.mxu0 0.0
        %681 = vmatpush1.msra.mxu0 0.0
        %682 = vmatprep.subr.mxu0 0.0
        %683 = vmatpush1.msra.mxu0 0.0
        %684 = vmatprep.subr.mxu0 0.0
        %685 = vmatpush1.msra.mxu0 0.0
        %686 = vmatprep.subr.mxu0 0.0
        %687 = vmatpush1.msra.mxu0 0.0
        %688 = vmatprep.subr.mxu0 0.0
        %689 = vmatpush1.msra.mxu0 0.0
        %690 = vmatprep.subr.mxu0 0.0
        %691 = vmatpush1.msra.mxu0 0.0
        %692 = vmatprep.subr.mxu0 0.0
        %693 = vmatpush1.msra.mxu0 0.0
        %694 = vmatprep.subr.mxu0 0.0
        %695 = vmatpush1.msra.mxu0 0.0
        %696 = vmatprep.subr.mxu0 0.0
        %697 = vmatpush1.msra.mxu0 0.0
        %698 = vmatprep.subr.mxu0 0.0
        %699 = vmatpush1.msra.mxu0 0.0
        %700 = vmatprep.subr.mxu0 0.0
        %701 = vmatpush1.msra.mxu0 0.0
        %702 = vmatprep.subr.mxu0 0.0
        %703 = vmatpush1.msra.mxu0 0.0
        %704 = vmatprep.subr.mxu0 0.0
        %705 = vmatpush1.msra.mxu0 0.0
        %706 = vmatprep.subr.mxu0 0.0
        %707 = vmatpush1.msra.mxu0 0.0
        %708 = vmatprep.subr.mxu0 0.0
        %709 = vmatpush1.msra.mxu0 0.0
        %710 = vmatprep.subr.mxu0 0.0
        %711 = vmatpush1.msra.mxu0 0.0
        %712 = vmatprep.subr.mxu0 0.0
        %713 = vmatpush1.msra.mxu0 0.0
        %714 = vmatprep.subr.mxu0 0.0
        %715 = vmatpush1.msra.mxu0 0.0
        %716 = vmatprep.subr.mxu0 0.0
        %717 = vmatpush1.msra.mxu0 0.0
        %718 = vmatprep.subr.mxu0 0.0
        %719 = vmatpush1.msra.mxu0 0.0
        %720 = vmatprep.subr.mxu0 0.0
        %721 = vmatpush1.msra.mxu0 0.0
        %722 = vmatprep.subr.mxu0 0.0
        %723 = vmatpush1.msra.mxu0 0.0
        %724 = vmatprep.subr.mxu0 0.0
        %725 = vmatpush1.msra.mxu0 0.0
        %726 = vmatprep.subr.mxu0 0.0
        %727 = vmatpush1.msra.mxu0 0.0
        %728 = vmatprep.mubr.f32.mxu0 0.0
        %729 = vmatmul.mubr.f32.gmra.mrb[0].mxu0 %v656
        %v730 = vpop.f32.mrb[0].mxu0
        %v731 = vadd.f32 0.0, %v730
        %v732 = vpop.f32.mrb[0].mxu0
        %733 = vmatprep.mubr.f32.mxu0 0.0
        %734 = vmatmul.mubr.f32.gmra.mrb[0].mxu0 %v659
        %v735 = vpop.f32.mrb[0].mxu0
        %v736 = vadd.f32 0.0, %v735
        %v737 = vpop.f32.mrb[0].mxu0
        %738 = vmatprep.mubr.f32.mxu0 0.0
        %739 = vmatmul.mubr.f32.gmra.mrb[0].mxu0 %v662
        %v740 = vpop.f32.mrb[0].mxu0
        %v741 = vadd.f32 0.0, %v740
        %v742 = vpop.f32.mrb[0].mxu0
        %743 = vdwg.mxu0
        %v745 = vsel %vm654, %v647, 0
        %v748 = vsel %vm654, %v648, 0
        %v751 = vsel %vm654, %v649, 0
        %753 = vmatprep.subr.mxu0 0.0
        %754 = vmatpush1.msra.mxu0 %v507
        %755 = vmatprep.subr.mxu0 0.0
        %756 = vmatpush1.msra.mxu0 %v508
        %757 = vmatprep.subr.mxu0 0.0
        %758 = vmatpush1.msra.mxu0 %v509
        %759 = vmatprep.subr.mxu0 0.0
        %760 = vmatpush1.msra.mxu0 %v510
        %761 = vmatprep.subr.mxu0 0.0
        %762 = vmatpush1.msra.mxu0 %v511
        %763 = vmatprep.subr.mxu0 0.0
        %764 = vmatpush1.msra.mxu0 %v512
        %765 = vmatprep.subr.mxu0 0.0
        %766 = vmatpush1.msra.mxu0 0.0
        %767 = vmatprep.subr.mxu0 0.0
        %768 = vmatpush1.msra.mxu0 0.0
        %769 = vmatprep.subr.mxu0 0.0
        %770 = vmatpush1.msra.mxu0 0.0
        %771 = vmatprep.subr.mxu0 0.0
        %772 = vmatpush1.msra.mxu0 0.0
        %773 = vmatprep.subr.mxu0 0.0
        %774 = vmatpush1.msra.mxu0 0.0
        %775 = vmatprep.subr.mxu0 0.0
        %776 = vmatpush1.msra.mxu0 0.0
        %777 = vmatprep.subr.mxu0 0.0
        %778 = vmatpush1.msra.mxu0 0.0
        %779 = vmatprep.subr.mxu0 0.0
        %780 = vmatpush1.msra.mxu0 0.0
        %781 = vmatprep.subr.mxu0 0.0
        %782 = vmatpush1.msra.mxu0 0.0
        %783 = vmatprep.subr.mxu0 0.0
        %784 = vmatpush1.msra.mxu0 0.0
        %785 = vmatprep.subr.mxu0 0.0
        %786 = vmatpush1.msra.mxu0 0.0
        %787 = vmatprep.subr.mxu0 0.0
        %788 = vmatpush1.msra.mxu0 0.0
        %789 = vmatprep.subr.mxu0 0.0
        %790 = vmatpush1.msra.mxu0 0.0
        %791 = vmatprep.subr.mxu0 0.0
        %792 = vmatpush1.msra.mxu0 0.0
        %793 = vmatprep.subr.mxu0 0.0
        %794 = vmatpush1.msra.mxu0 0.0
        %795 = vmatprep.subr.mxu0 0.0
        %796 = vmatpush1.msra.mxu0 0.0
        %797 = vmatprep.subr.mxu0 0.0
        %798 = vmatpush1.msra.mxu0 0.0
        %799 = vmatprep.subr.mxu0 0.0
        %800 = vmatpush1.msra.mxu0 0.0
        %801 = vmatprep.subr.mxu0 0.0
        %802 = vmatpush1.msra.mxu0 0.0
        %803 = vmatprep.subr.mxu0 0.0
        %804 = vmatpush1.msra.mxu0 0.0
        %805 = vmatprep.subr.mxu0 0.0
        %806 = vmatpush1.msra.mxu0 0.0
        %807 = vmatprep.subr.mxu0 0.0
        %808 = vmatpush1.msra.mxu0 0.0
        %809 = vmatprep.subr.mxu0 0.0
        %810 = vmatpush1.msra.mxu0 0.0
        %811 = vmatprep.subr.mxu0 0.0
        %812 = vmatpush1.msra.mxu0 0.0
        %813 = vmatprep.subr.mxu0 0.0
        %814 = vmatpush1.msra.mxu0 0.0
        %815 = vmatprep.subr.mxu0 0.0
        %816 = vmatpush1.msra.mxu0 0.0
        %817 = vmatprep.mubr.f32.mxu0 0.0
        %818 = vmatmul.mubr.f32.gmra.mrb[0].mxu0 %v745
        %v819 = vpop.f32.mrb[0].mxu0
        %v820 = vadd.f32 %v731, %v819
        %v821 = vpop.f32.mrb[0].mxu0
        %822 = vmatprep.mubr.f32.mxu0 0.0
        %823 = vmatmul.mubr.f32.gmra.mrb[0].mxu0 %v748
        %v824 = vpop.f32.mrb[0].mxu0
        %v825 = vadd.f32 %v736, %v824
        %v826 = vpop.f32.mrb[0].mxu0
        %827 = vmatprep.mubr.f32.mxu0 0.0
        %828 = vmatmul.mubr.f32.gmra.mrb[0].mxu0 %v751
        %v829 = vpop.f32.mrb[0].mxu0
        %v830 = vadd.f32 %v741, %v829
        %v831 = vpop.f32.mrb[0].mxu0
        %832 = vdwg.mxu0
        %v833 = vld [vmem:[%s3] sm:$0xff]
        %v834 = vld [vmem:[%s3 + $0x8] sm:$0xff]
        %v835 = vld [vmem:[%s3 + $0x10] sm:$0xf]
        %837 = vset.pattern.permute.xlu0 0
        %838 = vperm.xlu0 %837, %v833
        %v839 = vpop.permute.xlu0 %838
        %842 = vset.pattern.permute.xlu0 0
        %843 = vperm.xlu0 %842, %v834
        %v844 = vpop.permute.xlu0 %843
        %847 = vset.pattern.permute.xlu0 0
        %848 = vperm.xlu0 %847, %v835
        %v849 = vpop.permute.xlu0 %848
        %v851 = vadd.f32 %v820, %v839
        %v852 = vadd.f32 %v825, %v844
        %v853 = vadd.f32 %v830, %v849
        %v854 = vmax.f32 %v851, 0.0
        %v855 = vmax.f32 %v852, 0.0
        %v856 = vmax.f32 %v853, 0.0
        %v857 = vld [vmem:[%s4] sm:$0x1]
        %v858 = vld [vmem:[%s316] sm:$0x1]
        %s859 = sld [smem:[#allocation5 + $0x2]]
        %v860 = vstv %s859
        %v861 = vmul.f32 %v858, %v860
        %vm862 = vcmask 162816
        %v864 = vsel %vm862, %v857, 0
        %vm866 = vcmask 1043456
        %v868 = vsel %vm866, %v856, 0
        %870 = vmatprep.subr.mxu0 0.0
        %871 = vmatpush1.msra.mxu0 %v854
        %872 = vmatprep.subr.mxu0 0.0
        %873 = vmatpush1.msra.mxu0 %v855
        %874 = vmatprep.subr.mxu0 0.0
        %875 = vmatpush1.msra.mxu0 %v868
        %876 = vmatprep.subr.mxu0 0.0
        %877 = vmatpush1.msra.mxu0 0.0
        %878 = vmatprep.subr.mxu0 0.0
        %879 = vmatpush1.msra.mxu0 0.0
        %880 = vmatprep.subr.mxu0 0.0
        %881 = vmatpush1.msra.mxu0 0.0
        %882 = vmatprep.subr.mxu0 0.0
        %883 = vmatpush1.msra.mxu0 0.0
        %884 = vmatprep.subr.mxu0 0.0
        %885 = vmatpush1.msra.mxu0 0.0
        %886 = vmatprep.subr.mxu0 0.0
        %887 = vmatpush1.msra.mxu0 0.0
        %888 = vmatprep.subr.mxu0 0.0
        %889 = vmatpush1.msra.mxu0 0.0
        %890 = vmatprep.subr.mxu0 0.0
        %891 = vmatpush1.msra.mxu0 0.0
        %892 = vmatprep.subr.mxu0 0.0
        %893 = vmatpush1.msra.mxu0 0.0
        %894 = vmatprep.subr.mxu0 0.0
        %895 = vmatpush1.msra.mxu0 0.0
        %896 = vmatprep.subr.mxu0 0.0
        %897 = vmatpush1.msra.mxu0 0.0
        %898 = vmatprep.subr.mxu0 0.0
        %899 = vmatpush1.msra.mxu0 0.0
        %900 = vmatprep.subr.mxu0 0.0
        %901 = vmatpush1.msra.mxu0 0.0
        %902 = vmatprep.subr.mxu0 0.0
        %903 = vmatpush1.msra.mxu0 0.0
        %904 = vmatprep.subr.mxu0 0.0
        %905 = vmatpush1.msra.mxu0 0.0
        %906 = vmatprep.subr.mxu0 0.0
        %907 = vmatpush1.msra.mxu0 0.0
        %908 = vmatprep.subr.mxu0 0.0
        %909 = vmatpush1.msra.mxu0 0.0
        %910 = vmatprep.subr.mxu0 0.0
        %911 = vmatpush1.msra.mxu0 0.0
        %912 = vmatprep.subr.mxu0 0.0
        %913 = vmatpush1.msra.mxu0 0.0
        %914 = vmatprep.subr.mxu0 0.0
        %915 = vmatpush1.msra.mxu0 0.0
        %916 = vmatprep.subr.mxu0 0.0
        %917 = vmatpush1.msra.mxu0 0.0
        %918 = vmatprep.subr.mxu0 0.0
        %919 = vmatpush1.msra.mxu0 0.0
        %920 = vmatprep.subr.mxu0 0.0
        %921 = vmatpush1.msra.mxu0 0.0
        %922 = vmatprep.subr.mxu0 0.0
        %923 = vmatpush1.msra.mxu0 0.0
        %924 = vmatprep.subr.mxu0 0.0
        %925 = vmatpush1.msra.mxu0 0.0
        %926 = vmatprep.subr.mxu0 0.0
        %927 = vmatpush1.msra.mxu0 0.0
        %928 = vmatprep.subr.mxu0 0.0
        %929 = vmatpush1.msra.mxu0 0.0
        %930 = vmatprep.subr.mxu0 0.0
        %931 = vmatpush1.msra.mxu0 0.0
        %932 = vmatprep.subr.mxu0 0.0
        %933 = vmatpush1.msra.mxu0 0.0
        %934 = vmatprep.mubr.f32.mxu0 0.0
        %935 = vmatmul.mubr.f32.gmra.mrb[0].mxu0 %v864
        %v936 = vpop.f32.mrb[0].mxu0
        %v937 = vadd.f32 %v861, %v936
        %v938 = vpop.f32.mrb[0].mxu0
        %939 = vdwg.mxu0
        %s940 = sld [smem:[#allocation5 + $0x3]]
        %v941 = vstv %s940
        %v942 = vadd.f32 %v937, %v941
        %vm943 = vcmask 57344
        %v944 = vsel %vm943, %v942, -inf
        %945 = vmax.xlane.f32.xlu0 %v944
        %v946 = vpop.xlane.xlu0 %945
        %v947 = vmax.f32 %v946, 1.0
        %v948 = vsub.f32 %v942, %v947
        %v949 = vmul.f32 %v948, 1.442695
        %v950 = vpow.pop %v949
        %v951 = vsub.f32 1.0, %v947
        %v952 = vmul.f32 %v951, 1.442695
        %v953 = vpow.pop %v952
        %v954 = vsel %vm943, %v950, 0.0
        %955 = vadd.xlane.f32.xlu0 %v954
        %v956 = vpop.xlane.xlu0 %955
        %v957 = vadd.f32 %v956, %v953
        %v958 = vrcp.pop %v957
        %v959 = vmul.f32 %v953, %v958
        %vm960 = vcmask 0
        %961 = vst.msk [vmem:[%s308] sm:$0x1] %vm960, %v959
        %v962 = vmul.f32 %v950, %v958
        %964 = vrot.lane.b32.xlu0 %v962, 1
        %v965 = vpop.permute.xlu0 %964
        %vm967 = vcmask 65544
        %968 = vst.msk [vmem:[%s308] sm:$0x1] %vm967, %v965
        %s969 = sand.u32 %s188, 1
        %s970 = scalar_lea.sflag [#allocation3], %s969
        %s971 = sand.u32 %s188, 1
        %s972 = scalar_lea.vmem [#allocation7], %s971
        // Predicated region
        $region57: #{tpu_custom_call.1} parent=47 // pred_check
          %p973 = pneg %p198
        $region58: #{tpu_custom_call.1} parent=47 // pred_check_branch
          %975 = sbr.rel (%p973) target = $region60
        $region59: #{tpu_custom_call.1} parent=47 // pred_region
          %s977 = ssub.s32 16, 16
          %978 = vsyncadd %s970, %s977
          %s979 = smul.addr %s23, 16
          %s980 = scalar_lea.hbm %s7, %s979
          %s982 = sshll.u32 %s972, 4
          %s983 = int_to_ptr.vmem [resolvable:$true] %s982
          %985 = dma.vmem_to_hbm [thread:$0]  %s983, 16, %s980, %s970
        $region60: #{tpu_custom_call.1} parent=47 // pred_fallthru
          _
      $region48: #{tpu_custom_call.1} parent=5 // pred_fallthru
        _
      %p986 = scmp.le.s32.totalorder 2, %s18
      // Predicated region
      $region61: #{tpu_custom_call.1} parent=5 // pred_check
        %p987 = pneg %p986
      $region62: #{tpu_custom_call.1} parent=5 // pred_check_branch
        %989 = sbr.rel (%p987) target = $region64
      $region63: #{tpu_custom_call.1} parent=5 // pred_region
        %s990 = ssub.s32 %s18, 2
        // Predicated region
        $region65: #{tpu_custom_call.1} parent=63 // pred_check
          %p991 = pneg %p204
        $region66: #{tpu_custom_call.1} parent=63 // pred_check_branch
          %993 = sbr.rel (%p991) target = $region68
        $region67: #{tpu_custom_call.1} parent=63 // pred_region
          %s994 = sand.u32 %s189, 1
          %s995 = scalar_lea.sflag [#allocation3], %s994
          %s996 = sand.u32 %s189, 1
          %s997 = scalar_lea.vmem [#allocation7], %s996
          %998 = dma.done %s995, 16
        $region68: #{tpu_custom_call.1} parent=63 // pred_fallthru
          _
      $region64: #{tpu_custom_call.1} parent=5 // pred_fallthru
        _
    $region6: #{tpu_custom_call.1} parent=1 // loop_footer
      %s22 = sadd.s32 1, %s18
    $region7: #{tpu_custom_call.1} parent=1 // loop_footer_branch
      %17 = sbr.rel target = $region3
    $region8: #{tpu_custom_call.1} parent=1 // loop_exit
      _
    %999 = vsyncpa [#allocation3], 1
    %s1000 = scalar_lea.sflag [#allocation3], 1
    %1001 = vsyncpa %s1000, 1
    %1002 = vsyncpa [#allocation4], 1
    %s1003 = scalar_lea.sflag [#allocation4], 1
    %1004 = vsyncpa %s1003, 1
    %1005 = vsyncpa [#allocation6], 1

</llo_original>
